<compile_context>
chip_gen: v7x
topology: tpu7x:2x2x1
jax: 0.10.0
libtpu: 0.0.40
codegen_flags: <defaults>
</compile_context>

<pallas_src>
import functools

import jax
import jax.numpy as jnp
from jax.experimental import pallas as pl
from jax.experimental.pallas import tpu as pltpu


# ---------------------------------------------------------------------------
# elementwise RGB -> (selected) LAB channels
# ---------------------------------------------------------------------------
def _srgb_to_linear(c):
    # TODO(synk): on v6e/v7x a bf16 or minimax-poly pow(x, 2.4) would halve the
    # remaining EUP load; kept exact f32 for numerical parity (and for v5e).
    return jnp.where(c > 0.04045,
                     jnp.power((c + 0.055) / 1.055, 2.4),
                     c / 12.92)


def _cbrt_vpu(t):
    """Cube root of a non-negative f32 tensor using only VPU ops (no EUP).

    Bit-trick seed for t**(-1/3) followed by 3 division-free Newton steps
    (y <- y*(4 - t*y^3)/3), then cbrt(t) = t*y*y.  Relative error is at f32
    precision for the t range seen here (t in [0, ~1.1])."""
    tt = jnp.maximum(t, 1e-20)                       # keeps the seed finite at 0
    fb = pltpu.bitcast(tt, jnp.int32).astype(jnp.float32)
    sb = 1420470955.0 - fb * (1.0 / 3.0)             # ~= bit pattern of tt**(-1/3)
    y = pltpu.bitcast(sb.astype(jnp.int32), jnp.float32)
    t3 = tt * (1.0 / 3.0)
    for _ in range(3):                               # quadratic convergence
        y2 = y * y
        y = y * (4.0 / 3.0) - t3 * (y2 * y2)
    return tt * y * y


def _f_xyz(t, cbrt):
    eps = 0.008856
    return jnp.where(t > eps, cbrt(t), 7.787 * t + 16.0 / 116.0)


def _lab_channels(r_s, g_s, b_s, channel, cbrt):
    """sRGB channels (each (SUB,128) f32 in [0,1]) -> needed raw LAB channels."""
    r = _srgb_to_linear(r_s)
    g = _srgb_to_linear(g_s)
    b = _srgb_to_linear(b_s)
    Y = 0.212671 * r + 0.715160 * g + 0.072169 * b
    fy = _f_xyz(Y, cbrt)
    out = []
    if channel in ('l', 'lab'):
        out.append(116.0 * fy - 16.0)                 # L
    if channel in ('ab', 'lab'):
        X = (0.412453 * r + 0.357580 * g + 0.180423 * b) * (1.0 / 0.95047)
        Z = (0.019334 * r + 0.119193 * g + 0.950227 * b) * (1.0 / 1.08883)
        out.append(500.0 * (_f_xyz(X, cbrt) - fy))    # a
        out.append(200.0 * (fy - _f_xyz(Z, cbrt)))    # b
    return out


# TODO(synk): rgb_to_lab_norm2 source not provided; using the standard
# "unsignedL" normalization L/100, (a+128)/255, (b+128)/255.  The +128 offsets
# cancel in the plain L1 difference (both images use the identical
# normalization), so only the per-channel scale is applied to |diff|.
_CH_SCALES = {
    'l':   (1.0 / 100.0,),
    'ab':  (1.0 / 255.0, 1.0 / 255.0),
    'lab': (1.0 / 100.0, 1.0 / 255.0, 1.0 / 255.0),
}


# ---------------------------------------------------------------------------
# Pallas kernel: fused rgb->lab + per-lane |diff| accumulation into (8,128)
# ---------------------------------------------------------------------------
def _lab_l1_kernel(x_ref, y_ref, o_ref, *, channel, HW, TR, SUB, T):
    # grid = (B, P, T): b, p are parallel; t is the (last) reduction axis.
    p = pl.program_id(1)
    t = pl.program_id(2)

    @pl.when(t == 0)
    def _():
        o_ref[...] = jnp.zeros_like(o_ref)

    scales = _CH_SCALES[channel]
    nsub = TR // SUB
    row0 = (p * T + t) * TR                          # first pixel-row of block

    # loop-invariant relative flat pixel index of each element of a sub-chunk
    rel = (jax.lax.broadcasted_iota(jnp.int32, (SUB, 128), 0) * 128
           + jax.lax.broadcasted_iota(jnp.int32, (SUB, 128), 1))

    def load_masked_rgb(ref, sl, mask):
        # Per-channel loads keep only (SUB,128) slabs live (no (3,SUB,128) temp).
        # Masked-to-zero inputs keep the transcendental chain finite on garbage
        # rows (partial / over-cover blocks, pad tail) and make their |diff|
        # exactly 0, so nothing leaks into the accumulation.
        return [jnp.where(mask, ref[c, sl, :].astype(jnp.float32), 0.0)
                for c in range(3)]

    def body(s, acc):
        base = (row0 + s * SUB) * 128
        mask = (rel + base) < HW
        start = s * SUB
        if not isinstance(start, int):
            start = pl.multiple_of(start, SUB)
        sl = pl.ds(start, SUB)
        x_lab = _lab_channels(*load_masked_rgb(x_ref, sl, mask),
                              channel=channel, cbrt=_cbrt_vpu)
        y_lab = _lab_channels(*load_masked_rgb(y_ref, sl, mask),
                              channel=channel, cbrt=_cbrt_vpu)
        d = jnp.zeros((SUB, 128), jnp.float32)
        for xc, yc, sc in zip(x_lab, y_lab, scales):
            d = d + jnp.abs(xc - yc) * sc
        if SUB % 8 == 0:
            # Free reshape (matches native (8,128) tiling) + plain vreg adds.
            return acc + d.reshape(SUB // 8, 8, 128).sum(axis=0)
        # Tiny-tile fallback (R not a multiple of 8): spread the per-lane column
        # sum evenly over the 8 sublanes; /8 and the later x8 re-sum are exact
        # in binary, so the wrapper-side total is unchanged.
        col = d.sum(axis=0, keepdims=True) * 0.125
        return acc + jnp.broadcast_to(col, (8, 128))

    acc = jax.lax.fori_loop(0, nsub, body, jnp.zeros((8, 128), jnp.float32),
                            unroll=True if nsub <= 4 else 2)
    o_ref[...] += acc


def _num_tensorcores():
    """Best-effort TensorCores-per-chip query (v7x=2, v5e/v6e=1)."""
    try:
        info = pltpu.get_tpu_info()
    except Exception:
        return 1
    for name in ('num_cores', 'core_count', 'tensorcore_count',
                 'num_tensorcores', 'tensorcores_per_chip'):
        v = getattr(info, name, None)
        if isinstance(v, int) and v > 0:
            return v
    return 1


def lab_loss(x, y, channel='lab', tile_rows=1024, sub_rows=64,
             parallel_chunks=None):
    """LABLoss(channel, 'unsignedL', 'L1') forward.  x, y: NCHW RGB in [0,1]."""
    channel = channel.lower()
    if channel not in ('l', 'ab'):
        channel = 'lab'

    B, C, H, W = x.shape
    assert C == 3, "LABLoss expects 3-channel RGB input"
    HW = H * W
    n_ch = len(_CH_SCALES[channel])
    # Masked / padded positions contribute exactly 0 to the L1 sum, so the mean
    # divides by the true element count only (matches nn.L1Loss).
    n_valid = float(n_ch * B * HW)

    # Free (contiguous) view NCHW -> (B, 3, R, 128); no transpose copy.
    pad = (-HW) % 128
    xr = x.reshape(B, 3, HW)
    yr = y.reshape(B, 3, HW)
    if pad:
        # TODO(synk): only taken when H*W % 128 != 0; jnp.pad costs one extra
        # HBM pass over the inputs.  Avoiding it needs a manual-DMA (pl.ANY)
        # path; the padded tail itself is ignored by the in-kernel pixel mask.
        xr = jnp.pad(xr, ((0, 0), (0, 0), (0, pad)))
        yr = jnp.pad(yr, ((0, 0), (0, 0), (0, pad)))
    R = (HW + pad) // 128
    xr = xr.reshape(B, 3, R, 128)
    yr = yr.reshape(B, 3, R, 128)

    # Row tile: big (amortizes the ~0.35us grid-step overhead), multiple of the
    # sub-chunk size, clipped to the array.
    TR = min(tile_rows, R)
    if TR < R:
        TR = (TR // 64) * 64 if TR >= 64 else max(8, (TR // 8) * 8)
    if sub_rows > 0 and TR % sub_rows == 0:
        SUB = sub_rows
    elif TR % 8 == 0:
        SUB = 8
    else:
        SUB = TR                      # tiny-image case (R < 8 or not 8-aligned)
    NB = pl.cdiv(R, TR)               # row-blocks per image

    # Pixel-chunk parallelism: only useful on multi-TensorCore chips (v7x) when
    # the batch axis alone cannot feed both cores.
    if parallel_chunks is None:
        ntc = _num_tensorcores()
        P = ntc if (ntc > 1 and B < ntc) else 1
    else:
        P = max(1, int(parallel_chunks))
    P = min(P, NB)
    T = pl.cdiv(NB, P)                # row-blocks per chunk (reduction axis)

    kern = functools.partial(_lab_l1_kernel, channel=channel,
                             HW=HW, TR=TR, SUB=SUB, T=T)

    def in_map(b, p, t):
        # Clamp so over-covering chunks re-read the last block; their whole
        # tile is masked to zero inside the kernel.
        return (b, 0, jnp.minimum(p * T + t, NB - 1), 0)

    itemsize = jnp.dtype(x.dtype).itemsize
    in_buf_bytes = 2 * 2 * 3 * TR * 128 * itemsize    # 2 inputs, double-buffered
    vmem_limit = int(min(max(32 << 20, 2 * in_buf_bytes), 56 << 20))

    flops_per_px = {'l': 170, 'ab': 260, 'lab': 300}[channel]
    cost = pl.CostEstimate(
        flops=int(flops_per_px * B * HW),
        transcendentals=int(12 * B * HW),             # sRGB pow(.,2.4), x & y
        bytes_accessed=int(2 * B * 3 * (HW + pad) * itemsize
                           + B * P * 8 * 128 * 4))

    out = pl.pallas_call(
        kern,
        out_shape=jax.ShapeDtypeStruct((B, P, 8, 128), jnp.float32),
        grid_spec=pltpu.PrefetchScalarGridSpec(
            num_scalar_prefetch=0,
            grid=(B, P, T),
            in_specs=[pl.BlockSpec((None, 3, TR, 128), in_map),
                      pl.BlockSpec((None, 3, TR, 128), in_map)],
            out_specs=pl.BlockSpec((None, None, 8, 128),
                                   lambda b, p, t: (b, p, 0, 0)),
        ),
        compiler_params=pltpu.CompilerParams(
            dimension_semantics=("parallel", "parallel", "arbitrary"),
            vmem_limit_bytes=vmem_limit),
        cost_estimate=cost,
    )(xr, yr)

    # Tiny final cross-lane reduction + mean in XLA (better f32 accuracy too).
    return jnp.sum(out) / n_valid


# ---------------------------------------------------------------------------
# pure-JAX reference (silent correctness check; uses the transcendental cbrt)
# ---------------------------------------------------------------------------
def _cbrt_ref(t):
    return jnp.power(jnp.maximum(t, 1e-12), 1.0 / 3.0)


def _rgb_to_lab_norm2_ref(img):
    img = img.astype(jnp.float32)
    r = _srgb_to_linear(img[:, 0])
    g = _srgb_to_linear(img[:, 1])
    b = _srgb_to_linear(img[:, 2])
    X = (0.412453 * r + 0.357580 * g + 0.180423 * b) / 0.95047
    Y = 0.212671 * r + 0.715160 * g + 0.072169 * b
    Z = (0.019334 * r + 0.119193 * g + 0.950227 * b) / 1.08883
    fx = _f_xyz(X, _cbrt_ref)
    fy = _f_xyz(Y, _cbrt_ref)
    fz = _f_xyz(Z, _cbrt_ref)
    L = 116.0 * fy - 16.0
    a = 500.0 * (fx - fy)
    bb = 200.0 * (fy - fz)
    return jnp.stack([L / 100.0, (a + 128.0) / 255.0, (bb + 128.0) / 255.0],
                     axis=1)


def _lab_loss_ref(x, y, channel='lab'):
    xl = _rgb_to_lab_norm2_ref(x)
    yl = _rgb_to_lab_norm2_ref(y)
    ch = channel.lower()
    sl = {'l': slice(0, 1), 'ab': slice(1, 3)}.get(ch, slice(0, 3))
    return jnp.mean(jnp.abs(xl[:, sl] - yl[:, sl]))


if __name__ == "__main__":
    key = jax.random.PRNGKey(0)
    kx, ky = jax.random.split(key)
    # small NCHW RGB images in [0,1]
    x = jax.random.uniform(kx, (2, 3, 16, 16), dtype=jnp.float32)
    y = jax.random.uniform(ky, (2, 3, 16, 16), dtype=jnp.float32)

    for ch in ('lab', 'ab', 'l'):
        loss = jax.block_until_ready(lab_loss(x, y, channel=ch))
        ref = jax.block_until_ready(_lab_loss_ref(x, y, channel=ch))
        assert abs(float(loss) - float(ref)) < 1e-5, (ch, float(loss), float(ref))

    print("KERNEL_OK")
</pallas_src>

<mosaic_0001>
module attributes {stable_mosaic.version = 11 : i64} {
  func.func @_lab_l1_kernel(%arg0: i32, %arg1: i32, %arg2: i32, %arg3: memref<1x3x2x128xf32, #tpu.memory_space<vmem>>, %arg4: memref<1x3x2x128xf32, #tpu.memory_space<vmem>>, %arg5: memref<1x1x8x128xf32, #tpu.memory_space<vmem>>) attributes {dimension_semantics = [#tpu.dimension_semantics<parallel>, #tpu.dimension_semantics<parallel>, #tpu.dimension_semantics<arbitrary>], iteration_bounds = array<i64: 2, 1, 1>, scalar_prefetch = 0 : i64, scratch_operands = 0 : i64, tpu.core_type = #tpu.core_type<tc>, window_params = [{transform_indices = @transform_0, window_bounds = array<i64: 1, 3, 2, 128>}, {transform_indices = @transform_1, window_bounds = array<i64: 1, 3, 2, 128>}, {transform_indices = @transform_2, window_bounds = array<i64: 1, 1, 8, 128>}]} {
    %c0_i32 = arith.constant 0 : i32
    %0 = arith.cmpi eq, %arg2, %c0_i32 : i32
    %1 = arith.extui %0 : i1 to i32
    %c0_i32_0 = arith.constant 0 : i32
    %2 = arith.cmpi ne, %1, %c0_i32_0 : i32
    scf.if %2 {
      %cst_161 = arith.constant 0.000000e+00 : f32
      %456 = vector.broadcast %cst_161 : f32 to vector<8x128xf32>
      %c0_162 = arith.constant 0 : index
      %c0_163 = arith.constant 0 : index
      %c0_164 = arith.constant 0 : index
      %c0_165 = arith.constant 0 : index
      %457 = vector.load %arg5[%c0_162, %c0_163, %c0_164, %c0_165] : memref<1x1x8x128xf32, #tpu.memory_space<vmem>>, vector<1x1x8x128xf32>
      %458 = vector.shape_cast %457 : vector<1x1x8x128xf32> to vector<8x128xf32>
      %459 = vector.shape_cast %456 : vector<8x128xf32> to vector<1x1x8x128xf32>
      tpu.vector_store %arg5[%c0_162, %c0_163, %c0_164, %c0_165], %459 {strides = array<i32>} : memref<1x1x8x128xf32, #tpu.memory_space<vmem>>, vector<1x1x8x128xf32>,
    } else {
    }
    %c1_i32 = arith.constant 1 : i32
    %3 = arith.muli %arg1, %c1_i32 : i32
    %4 = arith.addi %3, %arg2 : i32
    %c2_i32 = arith.constant 2 : i32
    %5 = arith.muli %4, %c2_i32 : i32
    %6 = tpu.iota {dimensions = array<i32: 0>} : vector<2x128xi32>
    %c128_i32 = arith.constant 128 : i32
    %7 = vector.broadcast %c128_i32 : i32 to vector<2x128xi32>
    %8 = arith.muli %6, %7 : vector<2x128xi32>
    %9 = tpu.iota {dimensions = array<i32: 1>} : vector<2x128xi32>
    %10 = arith.addi %8, %9 : vector<2x128xi32>
    %cst = arith.constant 0.000000e+00 : f32
    %11 = vector.broadcast %cst : f32 to vector<8x128xf32>
    %c0_i32_1 = arith.constant 0 : i32
    %c2_i32_2 = arith.constant 2 : i32
    %12 = arith.muli %c0_i32_1, %c2_i32_2 : i32
    %13 = arith.addi %5, %12 : i32
    %c128_i32_3 = arith.constant 128 : i32
    %14 = arith.muli %13, %c128_i32_3 : i32
    %15 = vector.broadcast %14 : i32 to vector<2x128xi32>
    %16 = arith.addi %10, %15 : vector<2x128xi32>
    %c256_i32 = arith.constant 256 : i32
    %17 = vector.broadcast %c256_i32 : i32 to vector<2x128xi32>
    %18 = arith.cmpi slt, %16, %17 : vector<2x128xi32>
    %c2_i32_4 = arith.constant 2 : i32
    %19 = arith.muli %c0_i32_1, %c2_i32_4 : i32
    %20 = tpu.assume_multiple %19, 2 : i32
    %c0 = arith.constant 0 : index
    %c0_5 = arith.constant 0 : index
    %21 = arith.index_cast %20 : i32 to index
    %c0_6 = arith.constant 0 : index
    %22 = vector.load %arg3[%c0, %c0_5, %21, %c0_6] : memref<1x3x2x128xf32, #tpu.memory_space<vmem>>, vector<1x1x2x128xf32>
    %23 = vector.shape_cast %22 : vector<1x1x2x128xf32> to vector<2x128xf32>
    %cst_7 = arith.constant 0.000000e+00 : f32
    %24 = vector.broadcast %cst_7 : f32 to vector<2x128xf32>
    %25 = arith.select %18, %23, %24 : vector<2x128xi1>, vector<2x128xf32>
    %c0_8 = arith.constant 0 : index
    %c1 = arith.constant 1 : index
    %26 = arith.index_cast %20 : i32 to index
    %c0_9 = arith.constant 0 : index
    %27 = vector.load %arg3[%c0_8, %c1, %26, %c0_9] : memref<1x3x2x128xf32, #tpu.memory_space<vmem>>, vector<1x1x2x128xf32>
    %28 = vector.shape_cast %27 : vector<1x1x2x128xf32> to vector<2x128xf32>
    %cst_10 = arith.constant 0.000000e+00 : f32
    %29 = vector.broadcast %cst_10 : f32 to vector<2x128xf32>
    %30 = arith.select %18, %28, %29 : vector<2x128xi1>, vector<2x128xf32>
    %c0_11 = arith.constant 0 : index
    %c2 = arith.constant 2 : index
    %31 = arith.index_cast %20 : i32 to index
    %c0_12 = arith.constant 0 : index
    %32 = vector.load %arg3[%c0_11, %c2, %31, %c0_12] : memref<1x3x2x128xf32, #tpu.memory_space<vmem>>, vector<1x1x2x128xf32>
    %33 = vector.shape_cast %32 : vector<1x1x2x128xf32> to vector<2x128xf32>
    %cst_13 = arith.constant 0.000000e+00 : f32
    %34 = vector.broadcast %cst_13 : f32 to vector<2x128xf32>
    %35 = arith.select %18, %33, %34 : vector<2x128xi1>, vector<2x128xf32>
    %cst_14 = arith.constant 4.045000e-02 : f32
    %36 = vector.broadcast %cst_14 : f32 to vector<2x128xf32>
    %37 = arith.cmpf ogt, %25, %36 : vector<2x128xf32>
    %cst_15 = arith.constant 5.500000e-02 : f32
    %38 = vector.broadcast %cst_15 : f32 to vector<2x128xf32>
    %39 = arith.addf %25, %38 : vector<2x128xf32>
    %cst_16 = arith.constant 1.055000e+00 : f32
    %40 = vector.broadcast %cst_16 : f32 to vector<2x128xf32>
    %41 = arith.divf %39, %40 : vector<2x128xf32>
    %cst_17 = arith.constant 2.400000e+00 : f32
    %42 = vector.broadcast %cst_17 : f32 to vector<2x128xf32>
    %43 = math.powf %41, %42 : vector<2x128xf32>
    %cst_18 = arith.constant 1.292000e+01 : f32
    %44 = vector.broadcast %cst_18 : f32 to vector<2x128xf32>
    %45 = arith.divf %25, %44 : vector<2x128xf32>
    %46 = arith.select %37, %43, %45 : vector<2x128xi1>, vector<2x128xf32>
    %cst_19 = arith.constant 4.045000e-02 : f32
    %47 = vector.broadcast %cst_19 : f32 to vector<2x128xf32>
    %48 = arith.cmpf ogt, %30, %47 : vector<2x128xf32>
    %cst_20 = arith.constant 5.500000e-02 : f32
    %49 = vector.broadcast %cst_20 : f32 to vector<2x128xf32>
    %50 = arith.addf %30, %49 : vector<2x128xf32>
    %cst_21 = arith.constant 1.055000e+00 : f32
    %51 = vector.broadcast %cst_21 : f32 to vector<2x128xf32>
    %52 = arith.divf %50, %51 : vector<2x128xf32>
    %cst_22 = arith.constant 2.400000e+00 : f32
    %53 = vector.broadcast %cst_22 : f32 to vector<2x128xf32>
    %54 = math.powf %52, %53 : vector<2x128xf32>
    %cst_23 = arith.constant 1.292000e+01 : f32
    %55 = vector.broadcast %cst_23 : f32 to vector<2x128xf32>
    %56 = arith.divf %30, %55 : vector<2x128xf32>
    %57 = arith.select %48, %54, %56 : vector<2x128xi1>, vector<2x128xf32>
    %cst_24 = arith.constant 4.045000e-02 : f32
    %58 = vector.broadcast %cst_24 : f32 to vector<2x128xf32>
    %59 = arith.cmpf ogt, %35, %58 : vector<2x128xf32>
    %cst_25 = arith.constant 5.500000e-02 : f32
    %60 = vector.broadcast %cst_25 : f32 to vector<2x128xf32>
    %61 = arith.addf %35, %60 : vector<2x128xf32>
    %cst_26 = arith.constant 1.055000e+00 : f32
    %62 = vector.broadcast %cst_26 : f32 to vector<2x128xf32>
    %63 = arith.divf %61, %62 : vector<2x128xf32>
    %cst_27 = arith.constant 2.400000e+00 : f32
    %64 = vector.broadcast %cst_27 : f32 to vector<2x128xf32>
    %65 = math.powf %63, %64 : vector<2x128xf32>
    %cst_28 = arith.constant 1.292000e+01 : f32
    %66 = vector.broadcast %cst_28 : f32 to vector<2x128xf32>
    %67 = arith.divf %35, %66 : vector<2x128xf32>
    %68 = arith.select %59, %65, %67 : vector<2x128xi1>, vector<2x128xf32>
    %cst_29 = arith.constant 2.126710e-01 : f32
    %69 = vector.broadcast %cst_29 : f32 to vector<2x128xf32>
    %70 = arith.mulf %69, %46 : vector<2x128xf32>
    %cst_30 = arith.constant 7.151600e-01 : f32
    %71 = vector.broadcast %cst_30 : f32 to vector<2x128xf32>
    %72 = arith.mulf %71, %57 : vector<2x128xf32>
    %73 = arith.addf %70, %72 : vector<2x128xf32>
    %cst_31 = arith.constant 7.216900e-02 : f32
    %74 = vector.broadcast %cst_31 : f32 to vector<2x128xf32>
    %75 = arith.mulf %74, %68 : vector<2x128xf32>
    %76 = arith.addf %73, %75 : vector<2x128xf32>
    %cst_32 = arith.constant 8.856000e-03 : f32
    %77 = vector.broadcast %cst_32 : f32 to vector<2x128xf32>
    %78 = arith.cmpf ogt, %76, %77 : vector<2x128xf32>
    %cst_33 = arith.constant 9.99999968E-21 : f32
    %79 = vector.broadcast %cst_33 : f32 to vector<2x128xf32>
    %80 = arith.maximumf %76, %79 : vector<2x128xf32>
    %81 = tpu.bitcast %80 : vector<2x128xf32> -> vector<2x128xi32>
    %82 = arith.sitofp %81 : vector<2x128xi32> to vector<2x128xf32>
    %cst_34 = arith.constant 0.333333343 : f32
    %83 = vector.broadcast %cst_34 : f32 to vector<2x128xf32>
    %84 = arith.mulf %82, %83 : vector<2x128xf32>
    %cst_35 = arith.constant 1.42047091E+9 : f32
    %85 = vector.broadcast %cst_35 : f32 to vector<2x128xf32>
    %86 = arith.subf %85, %84 : vector<2x128xf32>
    %87 = arith.fptosi %86 : vector<2x128xf32> to vector<2x128xi32>
    %88 = tpu.bitcast %87 : vector<2x128xi32> -> vector<2x128xf32>
    %cst_36 = arith.constant 0.333333343 : f32
    %89 = vector.broadcast %cst_36 : f32 to vector<2x128xf32>
    %90 = arith.mulf %80, %89 : vector<2x128xf32>
    %91 = arith.mulf %88, %88 : vector<2x128xf32>
    %cst_37 = arith.constant 1.33333337 : f32
    %92 = vector.broadcast %cst_37 : f32 to vector<2x128xf32>
    %93 = arith.mulf %88, %92 : vector<2x128xf32>
    %94 = arith.mulf %91, %91 : vector<2x128xf32>
    %95 = arith.mulf %90, %94 : vector<2x128xf32>
    %96 = arith.subf %93, %95 : vector<2x128xf32>
    %97 = arith.mulf %96, %96 : vector<2x128xf32>
    %cst_38 = arith.constant 1.33333337 : f32
    %98 = vector.broadcast %cst_38 : f32 to vector<2x128xf32>
    %99 = arith.mulf %96, %98 : vector<2x128xf32>
    %100 = arith.mulf %97, %97 : vector<2x128xf32>
    %101 = arith.mulf %90, %100 : vector<2x128xf32>
    %102 = arith.subf %99, %101 : vector<2x128xf32>
    %103 = arith.mulf %102, %102 : vector<2x128xf32>
    %cst_39 = arith.constant 1.33333337 : f32
    %104 = vector.broadcast %cst_39 : f32 to vector<2x128xf32>
    %105 = arith.mulf %102, %104 : vector<2x128xf32>
    %106 = arith.mulf %103, %103 : vector<2x128xf32>
    %107 = arith.mulf %90, %106 : vector<2x128xf32>
    %108 = arith.subf %105, %107 : vector<2x128xf32>
    %109 = arith.mulf %80, %108 : vector<2x128xf32>
    %110 = arith.mulf %109, %108 : vector<2x128xf32>
    %cst_40 = arith.constant 7.787000e+00 : f32
    %111 = vector.broadcast %cst_40 : f32 to vector<2x128xf32>
    %112 = arith.mulf %111, %76 : vector<2x128xf32>
    %cst_41 = arith.constant 0.137931034 : f32
    %113 = vector.broadcast %cst_41 : f32 to vector<2x128xf32>
    %114 = arith.addf %112, %113 : vector<2x128xf32>
    %115 = arith.select %78, %110, %114 : vector<2x128xi1>, vector<2x128xf32>
    %cst_42 = arith.constant 1.160000e+02 : f32
    %116 = vector.broadcast %cst_42 : f32 to vector<2x128xf32>
    %117 = arith.mulf %116, %115 : vector<2x128xf32>
    %cst_43 = arith.constant 1.600000e+01 : f32
    %118 = vector.broadcast %cst_43 : f32 to vector<2x128xf32>
    %119 = arith.subf %117, %118 : vector<2x128xf32>
    %cst_44 = arith.constant 4.124530e-01 : f32
    %120 = vector.broadcast %cst_44 : f32 to vector<2x128xf32>
    %121 = arith.mulf %120, %46 : vector<2x128xf32>
    %cst_45 = arith.constant 3.575800e-01 : f32
    %122 = vector.broadcast %cst_45 : f32 to vector<2x128xf32>
    %123 = arith.mulf %122, %57 : vector<2x128xf32>
    %124 = arith.addf %121, %123 : vector<2x128xf32>
    %cst_46 = arith.constant 1.804230e-01 : f32
    %125 = vector.broadcast %cst_46 : f32 to vector<2x128xf32>
    %126 = arith.mulf %125, %68 : vector<2x128xf32>
    %127 = arith.addf %124, %126 : vector<2x128xf32>
    %cst_47 = arith.constant 1.05211103 : f32
    %128 = vector.broadcast %cst_47 : f32 to vector<2x128xf32>
    %129 = arith.mulf %127, %128 : vector<2x128xf32>
    %cst_48 = arith.constant 1.933400e-02 : f32
    %130 = vector.broadcast %cst_48 : f32 to vector<2x128xf32>
    %131 = arith.mulf %130, %46 : vector<2x128xf32>
    %cst_49 = arith.constant 1.191930e-01 : f32
    %132 = vector.broadcast %cst_49 : f32 to vector<2x128xf32>
    %133 = arith.mulf %132, %57 : vector<2x128xf32>
    %134 = arith.addf %131, %133 : vector<2x128xf32>
    %cst_50 = arith.constant 9.502270e-01 : f32
    %135 = vector.broadcast %cst_50 : f32 to vector<2x128xf32>
    %136 = arith.mulf %135, %68 : vector<2x128xf32>
    %137 = arith.addf %134, %136 : vector<2x128xf32>
    %cst_51 = arith.constant 0.918417036 : f32
    %138 = vector.broadcast %cst_51 : f32 to vector<2x128xf32>
    %139 = arith.mulf %137, %138 : vector<2x128xf32>
    %cst_52 = arith.constant 8.856000e-03 : f32
    %140 = vector.broadcast %cst_52 : f32 to vector<2x128xf32>
    %141 = arith.cmpf ogt, %129, %140 : vector<2x128xf32>
    %cst_53 = arith.constant 9.99999968E-21 : f32
    %142 = vector.broadcast %cst_53 : f32 to vector<2x128xf32>
    %143 = arith.maximumf %129, %142 : vector<2x128xf32>
    %144 = tpu.bitcast %143 : vector<2x128xf32> -> vector<2x128xi32>
    %145 = arith.sitofp %144 : vector<2x128xi32> to vector<2x128xf32>
    %cst_54 = arith.constant 0.333333343 : f32
    %146 = vector.broadcast %cst_54 : f32 to vector<2x128xf32>
    %147 = arith.mulf %145, %146 : vector<2x128xf32>
    %cst_55 = arith.constant 1.42047091E+9 : f32
    %148 = vector.broadcast %cst_55 : f32 to vector<2x128xf32>
    %149 = arith.subf %148, %147 : vector<2x128xf32>
    %150 = arith.fptosi %149 : vector<2x128xf32> to vector<2x128xi32>
    %151 = tpu.bitcast %150 : vector<2x128xi32> -> vector<2x128xf32>
    %cst_56 = arith.constant 0.333333343 : f32
    %152 = vector.broadcast %cst_56 : f32 to vector<2x128xf32>
    %153 = arith.mulf %143, %152 : vector<2x128xf32>
    %154 = arith.mulf %151, %151 : vector<2x128xf32>
    %cst_57 = arith.constant 1.33333337 : f32
    %155 = vector.broadcast %cst_57 : f32 to vector<2x128xf32>
    %156 = arith.mulf %151, %155 : vector<2x128xf32>
    %157 = arith.mulf %154, %154 : vector<2x128xf32>
    %158 = arith.mulf %153, %157 : vector<2x128xf32>
    %159 = arith.subf %156, %158 : vector<2x128xf32>
    %160 = arith.mulf %159, %159 : vector<2x128xf32>
    %cst_58 = arith.constant 1.33333337 : f32
    %161 = vector.broadcast %cst_58 : f32 to vector<2x128xf32>
    %162 = arith.mulf %159, %161 : vector<2x128xf32>
    %163 = arith.mulf %160, %160 : vector<2x128xf32>
    %164 = arith.mulf %153, %163 : vector<2x128xf32>
    %165 = arith.subf %162, %164 : vector<2x128xf32>
    %166 = arith.mulf %165, %165 : vector<2x128xf32>
    %cst_59 = arith.constant 1.33333337 : f32
    %167 = vector.broadcast %cst_59 : f32 to vector<2x128xf32>
    %168 = arith.mulf %165, %167 : vector<2x128xf32>
    %169 = arith.mulf %166, %166 : vector<2x128xf32>
    %170 = arith.mulf %153, %169 : vector<2x128xf32>
    %171 = arith.subf %168, %170 : vector<2x128xf32>
    %172 = arith.mulf %143, %171 : vector<2x128xf32>
    %173 = arith.mulf %172, %171 : vector<2x128xf32>
    %cst_60 = arith.constant 7.787000e+00 : f32
    %174 = vector.broadcast %cst_60 : f32 to vector<2x128xf32>
    %175 = arith.mulf %174, %129 : vector<2x128xf32>
    %cst_61 = arith.constant 0.137931034 : f32
    %176 = vector.broadcast %cst_61 : f32 to vector<2x128xf32>
    %177 = arith.addf %175, %176 : vector<2x128xf32>
    %178 = arith.select %141, %173, %177 : vector<2x128xi1>, vector<2x128xf32>
    %179 = arith.subf %178, %115 : vector<2x128xf32>
    %cst_62 = arith.constant 5.000000e+02 : f32
    %180 = vector.broadcast %cst_62 : f32 to vector<2x128xf32>
    %181 = arith.mulf %180, %179 : vector<2x128xf32>
    %cst_63 = arith.constant 8.856000e-03 : f32
    %182 = vector.broadcast %cst_63 : f32 to vector<2x128xf32>
    %183 = arith.cmpf ogt, %139, %182 : vector<2x128xf32>
    %cst_64 = arith.constant 9.99999968E-21 : f32
    %184 = vector.broadcast %cst_64 : f32 to vector<2x128xf32>
    %185 = arith.maximumf %139, %184 : vector<2x128xf32>
    %186 = tpu.bitcast %185 : vector<2x128xf32> -> vector<2x128xi32>
    %187 = arith.sitofp %186 : vector<2x128xi32> to vector<2x128xf32>
    %cst_65 = arith.constant 0.333333343 : f32
    %188 = vector.broadcast %cst_65 : f32 to vector<2x128xf32>
    %189 = arith.mulf %187, %188 : vector<2x128xf32>
    %cst_66 = arith.constant 1.42047091E+9 : f32
    %190 = vector.broadcast %cst_66 : f32 to vector<2x128xf32>
    %191 = arith.subf %190, %189 : vector<2x128xf32>
    %192 = arith.fptosi %191 : vector<2x128xf32> to vector<2x128xi32>
    %193 = tpu.bitcast %192 : vector<2x128xi32> -> vector<2x128xf32>
    %cst_67 = arith.constant 0.333333343 : f32
    %194 = vector.broadcast %cst_67 : f32 to vector<2x128xf32>
    %195 = arith.mulf %185, %194 : vector<2x128xf32>
    %196 = arith.mulf %193, %193 : vector<2x128xf32>
    %cst_68 = arith.constant 1.33333337 : f32
    %197 = vector.broadcast %cst_68 : f32 to vector<2x128xf32>
    %198 = arith.mulf %193, %197 : vector<2x128xf32>
    %199 = arith.mulf %196, %196 : vector<2x128xf32>
    %200 = arith.mulf %195, %199 : vector<2x128xf32>
    %201 = arith.subf %198, %200 : vector<2x128xf32>
    %202 = arith.mulf %201, %201 : vector<2x128xf32>
    %cst_69 = arith.constant 1.33333337 : f32
    %203 = vector.broadcast %cst_69 : f32 to vector<2x128xf32>
    %204 = arith.mulf %201, %203 : vector<2x128xf32>
    %205 = arith.mulf %202, %202 : vector<2x128xf32>
    %206 = arith.mulf %195, %205 : vector<2x128xf32>
    %207 = arith.subf %204, %206 : vector<2x128xf32>
    %208 = arith.mulf %207, %207 : vector<2x128xf32>
    %cst_70 = arith.constant 1.33333337 : f32
    %209 = vector.broadcast %cst_70 : f32 to vector<2x128xf32>
    %210 = arith.mulf %207, %209 : vector<2x128xf32>
    %211 = arith.mulf %208, %208 : vector<2x128xf32>
    %212 = arith.mulf %195, %211 : vector<2x128xf32>
    %213 = arith.subf %210, %212 : vector<2x128xf32>
    %214 = arith.mulf %185, %213 : vector<2x128xf32>
    %215 = arith.mulf %214, %213 : vector<2x128xf32>
    %cst_71 = arith.constant 7.787000e+00 : f32
    %216 = vector.broadcast %cst_71 : f32 to vector<2x128xf32>
    %217 = arith.mulf %216, %139 : vector<2x128xf32>
    %cst_72 = arith.constant 0.137931034 : f32
    %218 = vector.broadcast %cst_72 : f32 to vector<2x128xf32>
    %219 = arith.addf %217, %218 : vector<2x128xf32>
    %220 = arith.select %183, %215, %219 : vector<2x128xi1>, vector<2x128xf32>
    %221 = arith.subf %115, %220 : vector<2x128xf32>
    %cst_73 = arith.constant 2.000000e+02 : f32
    %222 = vector.broadcast %cst_73 : f32 to vector<2x128xf32>
    %223 = arith.mulf %222, %221 : vector<2x128xf32>
    %c0_74 = arith.constant 0 : index
    %c0_75 = arith.constant 0 : index
    %224 = arith.index_cast %20 : i32 to index
    %c0_76 = arith.constant 0 : index
    %225 = vector.load %arg4[%c0_74, %c0_75, %224, %c0_76] : memref<1x3x2x128xf32, #tpu.memory_space<vmem>>, vector<1x1x2x128xf32>
    %226 = vector.shape_cast %225 : vector<1x1x2x128xf32> to vector<2x128xf32>
    %cst_77 = arith.constant 0.000000e+00 : f32
    %227 = vector.broadcast %cst_77 : f32 to vector<2x128xf32>
    %228 = arith.select %18, %226, %227 : vector<2x128xi1>, vector<2x128xf32>
    %c0_78 = arith.constant 0 : index
    %c1_79 = arith.constant 1 : index
    %229 = arith.index_cast %20 : i32 to index
    %c0_80 = arith.constant 0 : index
    %230 = vector.load %arg4[%c0_78, %c1_79, %229, %c0_80] : memref<1x3x2x128xf32, #tpu.memory_space<vmem>>, vector<1x1x2x128xf32>
    %231 = vector.shape_cast %230 : vector<1x1x2x128xf32> to vector<2x128xf32>
    %cst_81 = arith.constant 0.000000e+00 : f32
    %232 = vector.broadcast %cst_81 : f32 to vector<2x128xf32>
    %233 = arith.select %18, %231, %232 : vector<2x128xi1>, vector<2x128xf32>
    %c0_82 = arith.constant 0 : index
    %c2_83 = arith.constant 2 : index
    %234 = arith.index_cast %20 : i32 to index
    %c0_84 = arith.constant 0 : index
    %235 = vector.load %arg4[%c0_82, %c2_83, %234, %c0_84] : memref<1x3x2x128xf32, #tpu.memory_space<vmem>>, vector<1x1x2x128xf32>
    %236 = vector.shape_cast %235 : vector<1x1x2x128xf32> to vector<2x128xf32>
    %cst_85 = arith.constant 0.000000e+00 : f32
    %237 = vector.broadcast %cst_85 : f32 to vector<2x128xf32>
    %238 = arith.select %18, %236, %237 : vector<2x128xi1>, vector<2x128xf32>
    %cst_86 = arith.constant 4.045000e-02 : f32
    %239 = vector.broadcast %cst_86 : f32 to vector<2x128xf32>
    %240 = arith.cmpf ogt, %228, %239 : vector<2x128xf32>
    %cst_87 = arith.constant 5.500000e-02 : f32
    %241 = vector.broadcast %cst_87 : f32 to vector<2x128xf32>
    %242 = arith.addf %228, %241 : vector<2x128xf32>
    %cst_88 = arith.constant 1.055000e+00 : f32
    %243 = vector.broadcast %cst_88 : f32 to vector<2x128xf32>
    %244 = arith.divf %242, %243 : vector<2x128xf32>
    %cst_89 = arith.constant 2.400000e+00 : f32
    %245 = vector.broadcast %cst_89 : f32 to vector<2x128xf32>
    %246 = math.powf %244, %245 : vector<2x128xf32>
    %cst_90 = arith.constant 1.292000e+01 : f32
    %247 = vector.broadcast %cst_90 : f32 to vector<2x128xf32>
    %248 = arith.divf %228, %247 : vector<2x128xf32>
    %249 = arith.select %240, %246, %248 : vector<2x128xi1>, vector<2x128xf32>
    %cst_91 = arith.constant 4.045000e-02 : f32
    %250 = vector.broadcast %cst_91 : f32 to vector<2x128xf32>
    %251 = arith.cmpf ogt, %233, %250 : vector<2x128xf32>
    %cst_92 = arith.constant 5.500000e-02 : f32
    %252 = vector.broadcast %cst_92 : f32 to vector<2x128xf32>
    %253 = arith.addf %233, %252 : vector<2x128xf32>
    %cst_93 = arith.constant 1.055000e+00 : f32
    %254 = vector.broadcast %cst_93 : f32 to vector<2x128xf32>
    %255 = arith.divf %253, %254 : vector<2x128xf32>
    %cst_94 = arith.constant 2.400000e+00 : f32
    %256 = vector.broadcast %cst_94 : f32 to vector<2x128xf32>
    %257 = math.powf %255, %256 : vector<2x128xf32>
    %cst_95 = arith.constant 1.292000e+01 : f32
    %258 = vector.broadcast %cst_95 : f32 to vector<2x128xf32>
    %259 = arith.divf %233, %258 : vector<2x128xf32>
    %260 = arith.select %251, %257, %259 : vector<2x128xi1>, vector<2x128xf32>
    %cst_96 = arith.constant 4.045000e-02 : f32
    %261 = vector.broadcast %cst_96 : f32 to vector<2x128xf32>
    %262 = arith.cmpf ogt, %238, %261 : vector<2x128xf32>
    %cst_97 = arith.constant 5.500000e-02 : f32
    %263 = vector.broadcast %cst_97 : f32 to vector<2x128xf32>
    %264 = arith.addf %238, %263 : vector<2x128xf32>
    %cst_98 = arith.constant 1.055000e+00 : f32
    %265 = vector.broadcast %cst_98 : f32 to vector<2x128xf32>
    %266 = arith.divf %264, %265 : vector<2x128xf32>
    %cst_99 = arith.constant 2.400000e+00 : f32
    %267 = vector.broadcast %cst_99 : f32 to vector<2x128xf32>
    %268 = math.powf %266, %267 : vector<2x128xf32>
    %cst_100 = arith.constant 1.292000e+01 : f32
    %269 = vector.broadcast %cst_100 : f32 to vector<2x128xf32>
    %270 = arith.divf %238, %269 : vector<2x128xf32>
    %271 = arith.select %262, %268, %270 : vector<2x128xi1>, vector<2x128xf32>
    %cst_101 = arith.constant 2.126710e-01 : f32
    %272 = vector.broadcast %cst_101 : f32 to vector<2x128xf32>
    %273 = arith.mulf %272, %249 : vector<2x128xf32>
    %cst_102 = arith.constant 7.151600e-01 : f32
    %274 = vector.broadcast %cst_102 : f32 to vector<2x128xf32>
    %275 = arith.mulf %274, %260 : vector<2x128xf32>
    %276 = arith.addf %273, %275 : vector<2x128xf32>
    %cst_103 = arith.constant 7.216900e-02 : f32
    %277 = vector.broadcast %cst_103 : f32 to vector<2x128xf32>
    %278 = arith.mulf %277, %271 : vector<2x128xf32>
    %279 = arith.addf %276, %278 : vector<2x128xf32>
    %cst_104 = arith.constant 8.856000e-03 : f32
    %280 = vector.broadcast %cst_104 : f32 to vector<2x128xf32>
    %281 = arith.cmpf ogt, %279, %280 : vector<2x128xf32>
    %cst_105 = arith.constant 9.99999968E-21 : f32
    %282 = vector.broadcast %cst_105 : f32 to vector<2x128xf32>
    %283 = arith.maximumf %279, %282 : vector<2x128xf32>
    %284 = tpu.bitcast %283 : vector<2x128xf32> -> vector<2x128xi32>
    %285 = arith.sitofp %284 : vector<2x128xi32> to vector<2x128xf32>
    %cst_106 = arith.constant 0.333333343 : f32
    %286 = vector.broadcast %cst_106 : f32 to vector<2x128xf32>
    %287 = arith.mulf %285, %286 : vector<2x128xf32>
    %cst_107 = arith.constant 1.42047091E+9 : f32
    %288 = vector.broadcast %cst_107 : f32 to vector<2x128xf32>
    %289 = arith.subf %288, %287 : vector<2x128xf32>
    %290 = arith.fptosi %289 : vector<2x128xf32> to vector<2x128xi32>
    %291 = tpu.bitcast %290 : vector<2x128xi32> -> vector<2x128xf32>
    %cst_108 = arith.constant 0.333333343 : f32
    %292 = vector.broadcast %cst_108 : f32 to vector<2x128xf32>
    %293 = arith.mulf %283, %292 : vector<2x128xf32>
    %294 = arith.mulf %291, %291 : vector<2x128xf32>
    %cst_109 = arith.constant 1.33333337 : f32
    %295 = vector.broadcast %cst_109 : f32 to vector<2x128xf32>
    %296 = arith.mulf %291, %295 : vector<2x128xf32>
    %297 = arith.mulf %294, %294 : vector<2x128xf32>
    %298 = arith.mulf %293, %297 : vector<2x128xf32>
    %299 = arith.subf %296, %298 : vector<2x128xf32>
    %300 = arith.mulf %299, %299 : vector<2x128xf32>
    %cst_110 = arith.constant 1.33333337 : f32
    %301 = vector.broadcast %cst_110 : f32 to vector<2x128xf32>
    %302 = arith.mulf %299, %301 : vector<2x128xf32>
    %303 = arith.mulf %300, %300 : vector<2x128xf32>
    %304 = arith.mulf %293, %303 : vector<2x128xf32>
    %305 = arith.subf %302, %304 : vector<2x128xf32>
    %306 = arith.mulf %305, %305 : vector<2x128xf32>
    %cst_111 = arith.constant 1.33333337 : f32
    %307 = vector.broadcast %cst_111 : f32 to vector<2x128xf32>
    %308 = arith.mulf %305, %307 : vector<2x128xf32>
    %309 = arith.mulf %306, %306 : vector<2x128xf32>
    %310 = arith.mulf %293, %309 : vector<2x128xf32>
    %311 = arith.subf %308, %310 : vector<2x128xf32>
    %312 = arith.mulf %283, %311 : vector<2x128xf32>
    %313 = arith.mulf %312, %311 : vector<2x128xf32>
    %cst_112 = arith.constant 7.787000e+00 : f32
    %314 = vector.broadcast %cst_112 : f32 to vector<2x128xf32>
    %315 = arith.mulf %314, %279 : vector<2x128xf32>
    %cst_113 = arith.constant 0.137931034 : f32
    %316 = vector.broadcast %cst_113 : f32 to vector<2x128xf32>
    %317 = arith.addf %315, %316 : vector<2x128xf32>
    %318 = arith.select %281, %313, %317 : vector<2x128xi1>, vector<2x128xf32>
    %cst_114 = arith.constant 1.160000e+02 : f32
    %319 = vector.broadcast %cst_114 : f32 to vector<2x128xf32>
    %320 = arith.mulf %319, %318 : vector<2x128xf32>
    %cst_115 = arith.constant 1.600000e+01 : f32
    %321 = vector.broadcast %cst_115 : f32 to vector<2x128xf32>
    %322 = arith.subf %320, %321 : vector<2x128xf32>
    %cst_116 = arith.constant 4.124530e-01 : f32
    %323 = vector.broadcast %cst_116 : f32 to vector<2x128xf32>
    %324 = arith.mulf %323, %249 : vector<2x128xf32>
    %cst_117 = arith.constant 3.575800e-01 : f32
    %325 = vector.broadcast %cst_117 : f32 to vector<2x128xf32>
    %326 = arith.mulf %325, %260 : vector<2x128xf32>
    %327 = arith.addf %324, %326 : vector<2x128xf32>
    %cst_118 = arith.constant 1.804230e-01 : f32
    %328 = vector.broadcast %cst_118 : f32 to vector<2x128xf32>
    %329 = arith.mulf %328, %271 : vector<2x128xf32>
    %330 = arith.addf %327, %329 : vector<2x128xf32>
    %cst_119 = arith.constant 1.05211103 : f32
    %331 = vector.broadcast %cst_119 : f32 to vector<2x128xf32>
    %332 = arith.mulf %330, %331 : vector<2x128xf32>
    %cst_120 = arith.constant 1.933400e-02 : f32
    %333 = vector.broadcast %cst_120 : f32 to vector<2x128xf32>
    %334 = arith.mulf %333, %249 : vector<2x128xf32>
    %cst_121 = arith.constant 1.191930e-01 : f32
    %335 = vector.broadcast %cst_121 : f32 to vector<2x128xf32>
    %336 = arith.mulf %335, %260 : vector<2x128xf32>
    %337 = arith.addf %334, %336 : vector<2x128xf32>
    %cst_122 = arith.constant 9.502270e-01 : f32
    %338 = vector.broadcast %cst_122 : f32 to vector<2x128xf32>
    %339 = arith.mulf %338, %271 : vector<2x128xf32>
    %340 = arith.addf %337, %339 : vector<2x128xf32>
    %cst_123 = arith.constant 0.918417036 : f32
    %341 = vector.broadcast %cst_123 : f32 to vector<2x128xf32>
    %342 = arith.mulf %340, %341 : vector<2x128xf32>
    %cst_124 = arith.constant 8.856000e-03 : f32
    %343 = vector.broadcast %cst_124 : f32 to vector<2x128xf32>
    %344 = arith.cmpf ogt, %332, %343 : vector<2x128xf32>
    %cst_125 = arith.constant 9.99999968E-21 : f32
    %345 = vector.broadcast %cst_125 : f32 to vector<2x128xf32>
    %346 = arith.maximumf %332, %345 : vector<2x128xf32>
    %347 = tpu.bitcast %346 : vector<2x128xf32> -> vector<2x128xi32>
    %348 = arith.sitofp %347 : vector<2x128xi32> to vector<2x128xf32>
    %cst_126 = arith.constant 0.333333343 : f32
    %349 = vector.broadcast %cst_126 : f32 to vector<2x128xf32>
    %350 = arith.mulf %348, %349 : vector<2x128xf32>
    %cst_127 = arith.constant 1.42047091E+9 : f32
    %351 = vector.broadcast %cst_127 : f32 to vector<2x128xf32>
    %352 = arith.subf %351, %350 : vector<2x128xf32>
    %353 = arith.fptosi %352 : vector<2x128xf32> to vector<2x128xi32>
    %354 = tpu.bitcast %353 : vector<2x128xi32> -> vector<2x128xf32>
    %cst_128 = arith.constant 0.333333343 : f32
    %355 = vector.broadcast %cst_128 : f32 to vector<2x128xf32>
    %356 = arith.mulf %346, %355 : vector<2x128xf32>
    %357 = arith.mulf %354, %354 : vector<2x128xf32>
    %cst_129 = arith.constant 1.33333337 : f32
    %358 = vector.broadcast %cst_129 : f32 to vector<2x128xf32>
    %359 = arith.mulf %354, %358 : vector<2x128xf32>
    %360 = arith.mulf %357, %357 : vector<2x128xf32>
    %361 = arith.mulf %356, %360 : vector<2x128xf32>
    %362 = arith.subf %359, %361 : vector<2x128xf32>
    %363 = arith.mulf %362, %362 : vector<2x128xf32>
    %cst_130 = arith.constant 1.33333337 : f32
    %364 = vector.broadcast %cst_130 : f32 to vector<2x128xf32>
    %365 = arith.mulf %362, %364 : vector<2x128xf32>
    %366 = arith.mulf %363, %363 : vector<2x128xf32>
    %367 = arith.mulf %356, %366 : vector<2x128xf32>
    %368 = arith.subf %365, %367 : vector<2x128xf32>
    %369 = arith.mulf %368, %368 : vector<2x128xf32>
    %cst_131 = arith.constant 1.33333337 : f32
    %370 = vector.broadcast %cst_131 : f32 to vector<2x128xf32>
    %371 = arith.mulf %368, %370 : vector<2x128xf32>
    %372 = arith.mulf %369, %369 : vector<2x128xf32>
    %373 = arith.mulf %356, %372 : vector<2x128xf32>
    %374 = arith.subf %371, %373 : vector<2x128xf32>
    %375 = arith.mulf %346, %374 : vector<2x128xf32>
    %376 = arith.mulf %375, %374 : vector<2x128xf32>
    %cst_132 = arith.constant 7.787000e+00 : f32
    %377 = vector.broadcast %cst_132 : f32 to vector<2x128xf32>
    %378 = arith.mulf %377, %332 : vector<2x128xf32>
    %cst_133 = arith.constant 0.137931034 : f32
    %379 = vector.broadcast %cst_133 : f32 to vector<2x128xf32>
    %380 = arith.addf %378, %379 : vector<2x128xf32>
    %381 = arith.select %344, %376, %380 : vector<2x128xi1>, vector<2x128xf32>
    %382 = arith.subf %381, %318 : vector<2x128xf32>
    %cst_134 = arith.constant 5.000000e+02 : f32
    %383 = vector.broadcast %cst_134 : f32 to vector<2x128xf32>
    %384 = arith.mulf %383, %382 : vector<2x128xf32>
    %cst_135 = arith.constant 8.856000e-03 : f32
    %385 = vector.broadcast %cst_135 : f32 to vector<2x128xf32>
    %386 = arith.cmpf ogt, %342, %385 : vector<2x128xf32>
    %cst_136 = arith.constant 9.99999968E-21 : f32
    %387 = vector.broadcast %cst_136 : f32 to vector<2x128xf32>
    %388 = arith.maximumf %342, %387 : vector<2x128xf32>
    %389 = tpu.bitcast %388 : vector<2x128xf32> -> vector<2x128xi32>
    %390 = arith.sitofp %389 : vector<2x128xi32> to vector<2x128xf32>
    %cst_137 = arith.constant 0.333333343 : f32
    %391 = vector.broadcast %cst_137 : f32 to vector<2x128xf32>
    %392 = arith.mulf %390, %391 : vector<2x128xf32>
    %cst_138 = arith.constant 1.42047091E+9 : f32
    %393 = vector.broadcast %cst_138 : f32 to vector<2x128xf32>
    %394 = arith.subf %393, %392 : vector<2x128xf32>
    %395 = arith.fptosi %394 : vector<2x128xf32> to vector<2x128xi32>
    %396 = tpu.bitcast %395 : vector<2x128xi32> -> vector<2x128xf32>
    %cst_139 = arith.constant 0.333333343 : f32
    %397 = vector.broadcast %cst_139 : f32 to vector<2x128xf32>
    %398 = arith.mulf %388, %397 : vector<2x128xf32>
    %399 = arith.mulf %396, %396 : vector<2x128xf32>
    %cst_140 = arith.constant 1.33333337 : f32
    %400 = vector.broadcast %cst_140 : f32 to vector<2x128xf32>
    %401 = arith.mulf %396, %400 : vector<2x128xf32>
    %402 = arith.mulf %399, %399 : vector<2x128xf32>
    %403 = arith.mulf %398, %402 : vector<2x128xf32>
    %404 = arith.subf %401, %403 : vector<2x128xf32>
    %405 = arith.mulf %404, %404 : vector<2x128xf32>
    %cst_141 = arith.constant 1.33333337 : f32
    %406 = vector.broadcast %cst_141 : f32 to vector<2x128xf32>
    %407 = arith.mulf %404, %406 : vector<2x128xf32>
    %408 = arith.mulf %405, %405 : vector<2x128xf32>
    %409 = arith.mulf %398, %408 : vector<2x128xf32>
    %410 = arith.subf %407, %409 : vector<2x128xf32>
    %411 = arith.mulf %410, %410 : vector<2x128xf32>
    %cst_142 = arith.constant 1.33333337 : f32
    %412 = vector.broadcast %cst_142 : f32 to vector<2x128xf32>
    %413 = arith.mulf %410, %412 : vector<2x128xf32>
    %414 = arith.mulf %411, %411 : vector<2x128xf32>
    %415 = arith.mulf %398, %414 : vector<2x128xf32>
    %416 = arith.subf %413, %415 : vector<2x128xf32>
    %417 = arith.mulf %388, %416 : vector<2x128xf32>
    %418 = arith.mulf %417, %416 : vector<2x128xf32>
    %cst_143 = arith.constant 7.787000e+00 : f32
    %419 = vector.broadcast %cst_143 : f32 to vector<2x128xf32>
    %420 = arith.mulf %419, %342 : vector<2x128xf32>
    %cst_144 = arith.constant 0.137931034 : f32
    %421 = vector.broadcast %cst_144 : f32 to vector<2x128xf32>
    %422 = arith.addf %420, %421 : vector<2x128xf32>
    %423 = arith.select %386, %418, %422 : vector<2x128xi1>, vector<2x128xf32>
    %424 = arith.subf %318, %423 : vector<2x128xf32>
    %cst_145 = arith.constant 2.000000e+02 : f32
    %425 = vector.broadcast %cst_145 : f32 to vector<2x128xf32>
    %426 = arith.mulf %425, %424 : vector<2x128xf32>
    %cst_146 = arith.constant 0.000000e+00 : f32
    %427 = vector.broadcast %cst_146 : f32 to vector<2x128xf32>
    %428 = arith.subf %119, %322 : vector<2x128xf32>
    %429 = math.absf %428 : vector<2x128xf32>
    %cst_147 = arith.constant 0.00999999977 : f32
    %430 = vector.broadcast %cst_147 : f32 to vector<2x128xf32>
    %431 = arith.mulf %429, %430 : vector<2x128xf32>
    %432 = arith.addf %427, %431 : vector<2x128xf32>
    %433 = arith.subf %181, %384 : vector<2x128xf32>
    %434 = math.absf %433 : vector<2x128xf32>
    %cst_148 = arith.constant 0.00392156886 : f32
    %435 = vector.broadcast %cst_148 : f32 to vector<2x128xf32>
    %436 = arith.mulf %434, %435 : vector<2x128xf32>
    %437 = arith.addf %432, %436 : vector<2x128xf32>
    %438 = arith.subf %223, %426 : vector<2x128xf32>
    %439 = math.absf %438 : vector<2x128xf32>
    %cst_149 = arith.constant 0.00392156886 : f32
    %440 = vector.broadcast %cst_149 : f32 to vector<2x128xf32>
    %441 = arith.mulf %439, %440 : vector<2x128xf32>
    %442 = arith.addf %437, %441 : vector<2x128xf32>
    %cst_150 = arith.constant dense<0.000000e+00> : vector<128xf32>
    %443 = vector.multi_reduction <add>, %442, %cst_150 [0] : vector<2x128xf32> to vector<128xf32>
    %444 = vector.shape_cast %443 : vector<128xf32> to vector<1x128xf32>
    %cst_151 = arith.constant 1.250000e-01 : f32
    %445 = vector.broadcast %cst_151 : f32 to vector<1x128xf32>
    %446 = arith.mulf %444, %445 : vector<1x128xf32>
    %447 = vector.shape_cast %446 : vector<1x128xf32> to vector<1x128xf32>
    %448 = vector.broadcast %447 : vector<1x128xf32> to vector<8x128xf32>
    %449 = arith.addf %11, %448 : vector<8x128xf32>
    %c1_i32_152 = arith.constant 1 : i32
    %c0_153 = arith.constant 0 : index
    %c0_154 = arith.constant 0 : index
    %c0_155 = arith.constant 0 : index
    %c0_156 = arith.constant 0 : index
    %450 = vector.load %arg5[%c0_153, %c0_154, %c0_155, %c0_156] : memref<1x1x8x128xf32, #tpu.memory_space<vmem>>, vector<1x1x8x128xf32>
    %451 = vector.shape_cast %450 : vector<1x1x8x128xf32> to vector<8x128xf32>
    %452 = arith.addf %451, %449 : vector<8x128xf32>
    %c0_157 = arith.constant 0 : index
    %c0_158 = arith.constant 0 : index
    %c0_159 = arith.constant 0 : index
    %c0_160 = arith.constant 0 : index
    %453 = vector.load %arg5[%c0_157, %c0_158, %c0_159, %c0_160] : memref<1x1x8x128xf32, #tpu.memory_space<vmem>>, vector<1x1x8x128xf32>
    %454 = vector.shape_cast %453 : vector<1x1x8x128xf32> to vector<8x128xf32>
    %455 = vector.shape_cast %452 : vector<8x128xf32> to vector<1x1x8x128xf32>
    tpu.vector_store %arg5[%c0_157, %c0_158, %c0_159, %c0_160], %455 {strides = array<i32>} : memref<1x1x8x128xf32, #tpu.memory_space<vmem>>, vector<1x1x8x128xf32>,
    return
  }
  func.func @transform_0(%arg0: i32, %arg1: i32, %arg2: i32) -> (i32, i32, i32, i32) {
    %c1_i32 = arith.constant 1 : i32
    %0 = arith.muli %arg1, %c1_i32 : i32
    %1 = arith.addi %0, %arg2 : i32
    %c0_i32 = arith.constant 0 : i32
    %2 = arith.minsi %1, %c0_i32 : i32
    %c0_i32_0 = arith.constant 0 : i32
    %c0_i32_1 = arith.constant 0 : i32
    %c0_i32_2 = arith.constant 0 : i32
    return %arg0, %c0_i32_0, %2, %c0_i32_1 : i32, i32, i32, i32
  }
  func.func @transform_1(%arg0: i32, %arg1: i32, %arg2: i32) -> (i32, i32, i32, i32) {
    %c1_i32 = arith.constant 1 : i32
    %0 = arith.muli %arg1, %c1_i32 : i32
    %1 = arith.addi %0, %arg2 : i32
    %c0_i32 = arith.constant 0 : i32
    %2 = arith.minsi %1, %c0_i32 : i32
    %c0_i32_0 = arith.constant 0 : i32
    %c0_i32_1 = arith.constant 0 : i32
    %c0_i32_2 = arith.constant 0 : i32
    return %arg0, %c0_i32_0, %2, %c0_i32_1 : i32, i32, i32, i32
  }
  func.func @transform_2(%arg0: i32, %arg1: i32, %arg2: i32) -> (i32, i32, i32, i32) {
    %c0_i32 = arith.constant 0 : i32
    %c0_i32_0 = arith.constant 0 : i32
    %c0_i32_1 = arith.constant 0 : i32
    return %arg0, %arg1, %c0_i32, %c0_i32_0 : i32, i32, i32, i32
  }
}

</mosaic_0001>

<llo_original>
// kernel: tpu_custom_call.1
$region0: #{tpu_custom_call.1}
  #allocation0 [shape = 'u32[]', space=smem, size = 0x4, offset = 0x4, fixed_abs, tag = 'smem constant byte address 0x4 - core index']
  #allocation1 [shape = 'u32[144,128]{1,0:T(1,128)}', space=vmem, size = 0x12000, scoped, tag = 'internal scratch']
  %s0 = inlined_call_operand.hbm [shape: f32[2,3,2,128], index: 0, kind: input, shape index: {}]
  %s1 = inlined_call_operand.hbm [shape: f32[2,3,2,128], index: 1, kind: input, shape index: {}]
  %s2 = inlined_call_operand.hbm [shape: f32[2,1,8,128], index: 2, kind: output, shape index: {}]
  %s3 = sld [smem:[#allocation0]]
  $region53: #{tpu_custom_call.1} parent=0
    _
  %s5 = ssub.s32 1, %s3
  %s6 = scalar_select 0, %s5, %s3
  $region1: #{tpu_custom_call.1} parent=0
    #allocation2 [shape = 'u8[6144]{0}', space=vmem, size = 0x1800, scoped, tag = 'input window, operand 0']
    #allocation3 [shape = 's32[2]{0}', space=sflag, size = 0x8, scoped, tag = 'scoped memory for tpu_custom_call.1']
    #allocation4 [shape = 's32[2]{0}', space=sflag, size = 0x8, scoped, tag = 'scoped memory for tpu_custom_call.1']
    #allocation5 [shape = 'u8[6144]{0}', space=vmem, size = 0x1800, scoped, tag = 'input window, operand 1']
    #allocation6 [shape = 's32[2]{0}', space=sflag, size = 0x8, scoped, tag = 'scoped memory for tpu_custom_call.1']
    #allocation7 [shape = 'u8[8192]{0}', space=vmem, size = 0x2000, scoped, tag = 'output window, operand 0']
    %7 = vsyncpa [#allocation3], 0
    %s8 = scalar_lea.sflag [#allocation3], 1
    %9 = vsyncpa %s8, 0
    %10 = vsyncpa [#allocation6], 0
    %s11 = scalar_lea.sflag [#allocation6], 1
    %12 = vsyncpa %s11, 0
    %13 = vsyncpa [#allocation4], 0
    %s14 = scalar_lea.sflag [#allocation4], 1
    %15 = vsyncpa %s14, 0
    loop: start=0, step=1, limit=4
    $region2: #{tpu_custom_call.1} parent=1 // loop_pre_header
      _
    $region3: #{tpu_custom_call.1} parent=1 // loop_header
      %s17 = sphi 0, %s21
      %p18 = scmp.ge.s32.totalorder %s17, 4
      %s24 = sphi 0, %s43
      %s25 = sphi 0, %s39
      %s26 = sphi 0, %s35
      %s27 = sphi 0, %s24
      %s28 = sphi 0, %s25
      %s29 = sphi 0, %s26
      %s30 = sphi 0, %s27
      %s31 = sphi 0, %s28
      %s32 = sphi 0, %s29
      %s54 = sphi 0, %s56
      %s57 = sphi 0, %s54
      %s58 = sphi 0, %s57
      %s74 = sphi 0, %s58
      %s88 = sphi 0, %s90
      %s91 = sphi 0, %s88
      %s92 = sphi 0, %s91
      %s108 = sphi 0, %s92
      %s116 = sphi 0, %s118
      %s119 = sphi 0, %s116
      %s120 = sphi 0, %s119
      %s136 = sphi 0, %s120
    $region4: #{tpu_custom_call.1} parent=1 // loop_header_branch
      %20 = sbr.rel (%p18) target = $region8
    $region5: #{tpu_custom_call.1} parent=1 // loop_body
      %s22 = ssub.s32 %s17, 1
      %s23 = ssub.s32 %s17, 2
      %s33 = sadd.s32 1, %s26
      %p34 = scmp.ge.s32.totalorder %s33, 1
      %s35 = scalar_select %p34, 0, %s33
      %s36 = sadd.s32 1, %s25
      %s37 = scalar_select %p34, %s36, %s25
      %p38 = scmp.ge.s32.totalorder %s37, 1
      %s39 = scalar_select %p38, 0, %s37
      %s40 = sadd.s32 1, %s24
      %s41 = scalar_select %p38, %s40, %s24
      %p42 = scmp.ge.s32.totalorder %s41, 2
      %s43 = scalar_select %p42, 0, %s41
      %s44 = sadd.s32 %s25, %s26
      %p45 = scmp.lt.s32.totalorder %s44, 0
      %s46 = scalar_select %p45, %s44, 0
      %s47 = sadd.s32 %s39, %s35
      %p48 = scmp.lt.s32.totalorder %s47, 0
      %s49 = scalar_select %p48, %s47, 0
      %s50 = ssub.s32 %s24, %s43
      %s51 = ssub.s32 %s46, %s49
      %s52 = sor.u32 %s50, %s51
      %p53 = scmp.eq.s32.totalorder %s52, 0
      %s55 = sadd.s32 %s54, 1
      %s56 = scalar_select %p53, %s54, %s55
      %p59 = pneg %p53
      %p60 = scmp.eq.s32.totalorder %s17, 1
      %p61 = por %p59, %p60
      %p62 = scmp.ne.s32.totalorder %s54, %s57
      %p63 = scmp.eq.s32.totalorder %s17, 0
      %p64 = por %p62, %p63
      %p65 = scmp.ne.s32.totalorder %s54, %s57
      %p66 = scmp.eq.s32.totalorder %s22, 1
      %p67 = por %p65, %p66
      %p68 = scmp.ne.s32.totalorder %s57, %s58
      %p69 = scmp.eq.s32.totalorder %s22, 0
      %p70 = por %p68, %p69
      %p71 = scmp.ne.s32.totalorder %s57, %s58
      %p72 = scmp.eq.s32.totalorder %s23, 1
      %p73 = por %p71, %p72
      %p75 = scmp.ne.s32.totalorder %s58, %s74
      %p76 = scmp.eq.s32.totalorder %s23, 0
      %p77 = por %p75, %p76
      %s78 = sadd.s32 %s25, %s26
      %p79 = scmp.lt.s32.totalorder %s78, 0
      %s80 = scalar_select %p79, %s78, 0
      %s81 = sadd.s32 %s39, %s35
      %p82 = scmp.lt.s32.totalorder %s81, 0
      %s83 = scalar_select %p82, %s81, 0
      %s84 = ssub.s32 %s24, %s43
      %s85 = ssub.s32 %s80, %s83
      %s86 = sor.u32 %s84, %s85
      %p87 = scmp.eq.s32.totalorder %s86, 0
      %s89 = sadd.s32 %s88, 1
      %s90 = scalar_select %p87, %s88, %s89
      %p93 = pneg %p87
      %p94 = scmp.eq.s32.totalorder %s17, 1
      %p95 = por %p93, %p94
      %p96 = scmp.ne.s32.totalorder %s88, %s91
      %p97 = scmp.eq.s32.totalorder %s17, 0
      %p98 = por %p96, %p97
      %p99 = scmp.ne.s32.totalorder %s88, %s91
      %p100 = scmp.eq.s32.totalorder %s22, 1
      %p101 = por %p99, %p100
      %p102 = scmp.ne.s32.totalorder %s91, %s92
      %p103 = scmp.eq.s32.totalorder %s22, 0
      %p104 = por %p102, %p103
      %p105 = scmp.ne.s32.totalorder %s91, %s92
      %p106 = scmp.eq.s32.totalorder %s23, 1
      %p107 = por %p105, %p106
      %p109 = scmp.ne.s32.totalorder %s92, %s108
      %p110 = scmp.eq.s32.totalorder %s23, 0
      %p111 = por %p109, %p110
      %s112 = ssub.s32 %s24, %s43
      %s113 = ssub.s32 %s25, %s39
      %s114 = sor.u32 %s112, %s113
      %p115 = scmp.eq.s32.totalorder %s114, 0
      %s117 = sadd.s32 %s116, 1
      %s118 = scalar_select %p115, %s116, %s117
      %p121 = pneg %p115
      %p122 = scmp.eq.s32.totalorder %s17, 1
      %p123 = por %p121, %p122
      %p124 = scmp.ne.s32.totalorder %s116, %s119
      %p125 = scmp.eq.s32.totalorder %s17, 0
      %p126 = por %p124, %p125
      %p127 = scmp.ne.s32.totalorder %s116, %s119
      %p128 = scmp.eq.s32.totalorder %s22, 1
      %p129 = por %p127, %p128
      %p130 = scmp.ne.s32.totalorder %s119, %s120
      %p131 = scmp.eq.s32.totalorder %s22, 0
      %p132 = por %p130, %p131
      %p133 = scmp.ne.s32.totalorder %s119, %s120
      %p134 = scmp.eq.s32.totalorder %s23, 1
      %p135 = por %p133, %p134
      %p137 = scmp.ne.s32.totalorder %s120, %s136
      %p138 = scmp.eq.s32.totalorder %s23, 0
      %p139 = por %p137, %p138
      %p140 = scmp.le.s32.totalorder 1, %s17
      %p141 = scmp.lt.s32.totalorder %s17, 3
      %p142 = pnand %p140, %p141
      %p143 = pneg %p142
      // Predicated region
      $region9: #{tpu_custom_call.1} parent=5 // pred_check
        _
      $region10: #{tpu_custom_call.1} parent=5 // pred_check_branch
        %145 = sbr.rel (%p142) target = $region12
      $region11: #{tpu_custom_call.1} parent=5 // pred_region
        %s146 = ssub.s32 %s17, 1
      $region12: #{tpu_custom_call.1} parent=5 // pred_fallthru
        _
      %p147 = scmp.lt.s32.totalorder %s17, 2
      // Predicated region
      $region13: #{tpu_custom_call.1} parent=5 // pred_check
        %p148 = pneg %p147
      $region14: #{tpu_custom_call.1} parent=5 // pred_check_branch
        %150 = sbr.rel (%p148) target = $region16
      $region15: #{tpu_custom_call.1} parent=5 // pred_region
        // Predicated region
        $region17: #{tpu_custom_call.1} parent=15 // pred_check
          %p151 = pneg %p64
        $region18: #{tpu_custom_call.1} parent=15 // pred_check_branch
          %153 = sbr.rel (%p151) target = $region20
        $region19: #{tpu_custom_call.1} parent=15 // pred_region
          %s154 = sand.u32 %s54, 1
          %s155 = scalar_lea.sflag [#allocation3], %s154
          %s156 = sand.u32 %s54, 1
          %s157 = smul.addr %s156, 6
          %s158 = scalar_lea.vmem [#allocation2], %s157
          %s159 = sadd.s32 %s25, %s26
          %p160 = scmp.lt.s32.totalorder %s159, 0
          %s161 = scalar_select %p160, %s159, 0
          %s163 = ssub.s32 96, 96
          %164 = vsyncadd %s155, %s163
          %s165 = smul.addr %s24, 3
          %s166 = sadd.s32 %s161, %s165
          %s167 = smul.addr %s166, 32
          %s168 = scalar_lea.hbm %s0, %s167
          %s169 = sshll.u32 %s158, 4
          %s170 = int_to_ptr.vmem [resolvable:$true] %s169
          %175 = dma.hbm_to_vmem [thread:$0]  %s168, 96, %s170, %s155, 32, 32, 2
        $region20: #{tpu_custom_call.1} parent=15 // pred_fallthru
          _
        // Predicated region
        $region21: #{tpu_custom_call.1} parent=15 // pred_check
          %p176 = pneg %p98
        $region22: #{tpu_custom_call.1} parent=15 // pred_check_branch
          %178 = sbr.rel (%p176) target = $region24
        $region23: #{tpu_custom_call.1} parent=15 // pred_region
          %s179 = sand.u32 %s88, 1
          %s180 = scalar_lea.sflag [#allocation6], %s179
          %s181 = sand.u32 %s88, 1
          %s182 = smul.addr %s181, 6
          %s183 = scalar_lea.vmem [#allocation5], %s182
          %s184 = sadd.s32 %s25, %s26
          %p185 = scmp.lt.s32.totalorder %s184, 0
          %s186 = scalar_select %p185, %s184, 0
          %s188 = ssub.s32 96, 96
          %189 = vsyncadd %s180, %s188
          %s190 = smul.addr %s24, 3
          %s191 = sadd.s32 %s186, %s190
          %s192 = smul.addr %s191, 32
          %s193 = scalar_lea.hbm %s1, %s192
          %s194 = sshll.u32 %s183, 4
          %s195 = int_to_ptr.vmem [resolvable:$true] %s194
          %200 = dma.hbm_to_vmem [thread:$0]  %s193, 96, %s195, %s180, 32, 32, 2
        $region24: #{tpu_custom_call.1} parent=15 // pred_fallthru
          _
      $region16: #{tpu_custom_call.1} parent=5 // pred_fallthru
        _
      %p201 = scmp.le.s32.totalorder 1, %s17
      %p202 = scmp.lt.s32.totalorder %s17, 3
      %p203 = pnand %p201, %p202
      %p204 = pneg %p203
      // Predicated region
      $region25: #{tpu_custom_call.1} parent=5 // pred_check
        _
      $region26: #{tpu_custom_call.1} parent=5 // pred_check_branch
        %206 = sbr.rel (%p203) target = $region28
      $region27: #{tpu_custom_call.1} parent=5 // pred_region
        %s207 = ssub.s32 %s17, 1
        %s208 = sand.u32 %s57, 1
        %s209 = scalar_lea.sflag [#allocation3], %s208
        %s210 = sand.u32 %s57, 1
        %s211 = smul.addr %s210, 6
        %s212 = scalar_lea.vmem [#allocation2], %s211
        // Predicated region
        $region29: #{tpu_custom_call.1} parent=27 // pred_check
          %p213 = pneg %p70
        $region30: #{tpu_custom_call.1} parent=27 // pred_check_branch
          %215 = sbr.rel (%p213) target = $region32
        $region31: #{tpu_custom_call.1} parent=27 // pred_region
          %216 = dma.done %s209, 96
        $region32: #{tpu_custom_call.1} parent=27 // pred_fallthru
          _
        %s217 = sand.u32 %s91, 1
        %s218 = scalar_lea.sflag [#allocation6], %s217
        %s219 = sand.u32 %s91, 1
        %s220 = smul.addr %s219, 6
        %s221 = scalar_lea.vmem [#allocation5], %s220
        // Predicated region
        $region33: #{tpu_custom_call.1} parent=27 // pred_check
          %p222 = pneg %p104
        $region34: #{tpu_custom_call.1} parent=27 // pred_check_branch
          %224 = sbr.rel (%p222) target = $region36
        $region35: #{tpu_custom_call.1} parent=27 // pred_region
          %225 = dma.done %s218, 96
        $region36: #{tpu_custom_call.1} parent=27 // pred_fallthru
          _
        %s226 = sand.u32 %s57, 1
        %s227 = scalar_lea.sflag [#allocation3], %s226
        %s228 = sand.u32 %s57, 1
        %s229 = smul.addr %s228, 6
        %s230 = scalar_lea.vmem [#allocation2], %s229
        %p231 = pneg %p70
        %p232 = pneg %p67
        %s233 = sand.u32 %s91, 1
        %s234 = scalar_lea.sflag [#allocation6], %s233
        %s235 = sand.u32 %s91, 1
        %s236 = smul.addr %s235, 6
        %s237 = scalar_lea.vmem [#allocation5], %s236
        %p238 = pneg %p104
        %p239 = pneg %p101
        %p240 = pneg %p132
        %p241 = pneg %p129
        %s242 = sand.u32 %s119, 1
        %s243 = scalar_lea.sflag [#allocation4], %s242
        %s244 = sand.u32 %s119, 1
        %s245 = smul.addr %s244, 8
        %s246 = scalar_lea.vmem [#allocation7], %s245
        %s247 = sadd.s32 %s28, %s29
        %p248 = scmp.lt.s32.totalorder %s247, 0
        %s249 = scalar_select %p248, %s247, 0
        %s250 = sadd.s32 %s28, %s29
        %p251 = scmp.lt.s32.totalorder %s250, 0
        %s252 = scalar_select %p251, %s250, 0
        %p253 = scmp.eq.s32.totalorder %s29, 0
        // Predicated region
        $region37: #{tpu_custom_call.1} parent=27 // pred_check
          %p254 = pneg %p253
        $region38: #{tpu_custom_call.1} parent=27 // pred_check_branch
          %256 = sbr.rel (%p254) target = $region40
        $region39: #{tpu_custom_call.1} parent=27 // pred_region
          %257 = vst [vmem:[%s246] sm:$0xff] 0.0
        $region40: #{tpu_custom_call.1} parent=27 // pred_fallthru
          _
        %s258 = sadd.s32 %s28, %s29
        %v259 = vlaneseq
        %v260 = vshrl.u32 %v259, 7
        %v261 = vmul.u32 %v260, 128
        %v262 = vlaneseq
        %v263 = vand.u32 %v262, 127
        %v264 = vadd.s32 %v261, %v263
        %s265 = smul.u32 %s258, 256
        %v266 = vstv %s265
        %v267 = vadd.s32 %v264, %v266
        %vm268 = vcmp.lt.s32.totalorder %v267, 256
        %v269 = vld [vmem:[%s212] sm:$0x3]
        %v270 = vsel %vm268, %v269, 0.0
        %s271 = sadd.s32 0, 2
        %s272 = scalar_lea.vmem %s212, %s271 [#allocation2]
        %v273 = vld [vmem:[%s272] sm:$0x3]
        %v274 = vsel %vm268, %v273, 0.0
        %s275 = sadd.s32 0, 4
        %s276 = scalar_lea.vmem %s212, %s275 [#allocation2]
        %v277 = vld [vmem:[%s276] sm:$0x3]
        %v278 = vsel %vm268, %v277, 0.0
        %vm279 = vcmp.gt.f32.partialorder %v270, 0.04045
        %v280 = vadd.f32 %v270, 0.055
        %v281 = vrcp.pop 1.055
        %v282 = vmul.f32 %v280, %v281
        %v283 = vpow.f32 %v282, 2.4
        %v284 = vrcp.pop 12.92
        %v285 = vmul.f32 %v270, %v284
        %v286 = vsel %vm279, %v283, %v285
        %vm287 = vcmp.gt.f32.partialorder %v274, 0.04045
        %v288 = vadd.f32 %v274, 0.055
        %v289 = vmul.f32 %v288, %v281
        %v290 = vpow.f32 %v289, 2.4
        %v291 = vmul.f32 %v274, %v284
        %v292 = vsel %vm287, %v290, %v291
        %vm293 = vcmp.gt.f32.partialorder %v278, 0.04045
        %v294 = vadd.f32 %v278, 0.055
        %v295 = vmul.f32 %v294, %v281
        %v296 = vpow.f32 %v295, 2.4
        %v297 = vmul.f32 %v278, %v284
        %v298 = vsel %vm293, %v296, %v297
        %v299 = vmul.f32 %v286, 0.212671
        %v300 = vmul.f32 %v292, 0.71516
        %v301 = vadd.f32 %v299, %v300
        %v302 = vmul.f32 %v298, 0.072169
        %v303 = vadd.f32 %v301, %v302
        %vm304 = vcmp.gt.f32.partialorder %v303, 0.008856
        %v305 = vmax.f32 %v303, 1e-20
        %v307 = vcvt.s32.f32 %v305
        %v308 = vmul.f32 %v307, 0.33333334
        %v309 = vsub.f32 1.4204709e+09, %v308
        %v310 = vcvt.f32.s32.to.zero.pseudo %v309
        %v312 = vmul.f32 %v305, 0.33333334
        %v313 = vmul.f32 %v310, %v310
        %v314 = vmul.f32 %v310, 1.3333334
        %v315 = vmul.f32 %v313, %v313
        %v316 = vmul.f32 %v312, %v315
        %v317 = vsub.f32 %v314, %v316
        %v318 = vmul.f32 %v317, %v317
        %v319 = vmul.f32 %v317, 1.3333334
        %v320 = vmul.f32 %v318, %v318
        %v321 = vmul.f32 %v312, %v320
        %v322 = vsub.f32 %v319, %v321
        %v323 = vmul.f32 %v322, %v322
        %v324 = vmul.f32 %v322, 1.3333334
        %v325 = vmul.f32 %v323, %v323
        %v326 = vmul.f32 %v312, %v325
        %v327 = vsub.f32 %v324, %v326
        %v328 = vmul.f32 %v305, %v327
        %v329 = vmul.f32 %v328, %v327
        %v330 = vmul.f32 %v303, 7.787
        %v331 = vadd.f32 %v330, 0.13793103
        %v332 = vsel %vm304, %v329, %v331
        %v333 = vmul.f32 %v332, 116.0
        %v334 = vsub.f32 %v333, 16.0
        %v335 = vmul.f32 %v286, 0.412453
        %v336 = vmul.f32 %v292, 0.35758
        %v337 = vadd.f32 %v335, %v336
        %v338 = vmul.f32 %v298, 0.180423
        %v339 = vadd.f32 %v337, %v338
        %v340 = vmul.f32 %v339, 1.052111
        %v341 = vmul.f32 %v286, 0.019334
        %v342 = vmul.f32 %v292, 0.119193
        %v343 = vadd.f32 %v341, %v342
        %v344 = vmul.f32 %v298, 0.950227
        %v345 = vadd.f32 %v343, %v344
        %v346 = vmul.f32 %v345, 0.91841704
        %vm347 = vcmp.gt.f32.partialorder %v340, 0.008856
        %v348 = vmax.f32 %v340, 1e-20
        %v350 = vcvt.s32.f32 %v348
        %v351 = vmul.f32 %v350, 0.33333334
        %v352 = vsub.f32 1.4204709e+09, %v351
        %v353 = vcvt.f32.s32.to.zero.pseudo %v352
        %v355 = vmul.f32 %v348, 0.33333334
        %v356 = vmul.f32 %v353, %v353
        %v357 = vmul.f32 %v353, 1.3333334
        %v358 = vmul.f32 %v356, %v356
        %v359 = vmul.f32 %v355, %v358
        %v360 = vsub.f32 %v357, %v359
        %v361 = vmul.f32 %v360, %v360
        %v362 = vmul.f32 %v360, 1.3333334
        %v363 = vmul.f32 %v361, %v361
        %v364 = vmul.f32 %v355, %v363
        %v365 = vsub.f32 %v362, %v364
        %v366 = vmul.f32 %v365, %v365
        %v367 = vmul.f32 %v365, 1.3333334
        %v368 = vmul.f32 %v366, %v366
        %v369 = vmul.f32 %v355, %v368
        %v370 = vsub.f32 %v367, %v369
        %v371 = vmul.f32 %v348, %v370
        %v372 = vmul.f32 %v371, %v370
        %v373 = vmul.f32 %v340, 7.787
        %v374 = vadd.f32 %v373, 0.13793103
        %v375 = vsel %vm347, %v372, %v374
        %v376 = vsub.f32 %v375, %v332
        %v377 = vmul.f32 %v376, 500.0
        %vm378 = vcmp.gt.f32.partialorder %v346, 0.008856
        %v379 = vmax.f32 %v346, 1e-20
        %v381 = vcvt.s32.f32 %v379
        %v382 = vmul.f32 %v381, 0.33333334
        %v383 = vsub.f32 1.4204709e+09, %v382
        %v384 = vcvt.f32.s32.to.zero.pseudo %v383
        %v386 = vmul.f32 %v379, 0.33333334
        %v387 = vmul.f32 %v384, %v384
        %v388 = vmul.f32 %v384, 1.3333334
        %v389 = vmul.f32 %v387, %v387
        %v390 = vmul.f32 %v386, %v389
        %v391 = vsub.f32 %v388, %v390
        %v392 = vmul.f32 %v391, %v391
        %v393 = vmul.f32 %v391, 1.3333334
        %v394 = vmul.f32 %v392, %v392
        %v395 = vmul.f32 %v386, %v394
        %v396 = vsub.f32 %v393, %v395
        %v397 = vmul.f32 %v396, %v396
        %v398 = vmul.f32 %v396, 1.3333334
        %v399 = vmul.f32 %v397, %v397
        %v400 = vmul.f32 %v386, %v399
        %v401 = vsub.f32 %v398, %v400
        %v402 = vmul.f32 %v379, %v401
        %v403 = vmul.f32 %v402, %v401
        %v404 = vmul.f32 %v346, 7.787
        %v405 = vadd.f32 %v404, 0.13793103
        %v406 = vsel %vm378, %v403, %v405
        %v407 = vsub.f32 %v332, %v406
        %v408 = vmul.f32 %v407, 200.0
        %v409 = vld [vmem:[%s221] sm:$0x3]
        %v410 = vsel %vm268, %v409, 0.0
        %s411 = scalar_lea.vmem %s221, %s271 [#allocation5]
        %v412 = vld [vmem:[%s411] sm:$0x3]
        %v413 = vsel %vm268, %v412, 0.0
        %s414 = scalar_lea.vmem %s221, %s275 [#allocation5]
        %v415 = vld [vmem:[%s414] sm:$0x3]
        %v416 = vsel %vm268, %v415, 0.0
        %vm417 = vcmp.gt.f32.partialorder %v410, 0.04045
        %v418 = vadd.f32 %v410, 0.055
        %v419 = vmul.f32 %v418, %v281
        %v420 = vpow.f32 %v419, 2.4
        %v421 = vmul.f32 %v410, %v284
        %v422 = vsel %vm417, %v420, %v421
        %vm423 = vcmp.gt.f32.partialorder %v413, 0.04045
        %v424 = vadd.f32 %v413, 0.055
        %v425 = vmul.f32 %v424, %v281
        %v426 = vpow.f32 %v425, 2.4
        %v427 = vmul.f32 %v413, %v284
        %v428 = vsel %vm423, %v426, %v427
        %vm429 = vcmp.gt.f32.partialorder %v416, 0.04045
        %v430 = vadd.f32 %v416, 0.055
        %v431 = vmul.f32 %v430, %v281
        %v432 = vpow.f32 %v431, 2.4
        %v433 = vmul.f32 %v416, %v284
        %v434 = vsel %vm429, %v432, %v433
        %v435 = vmul.f32 %v422, 0.212671
        %v436 = vmul.f32 %v428, 0.71516
        %v437 = vadd.f32 %v435, %v436
        %v438 = vmul.f32 %v434, 0.072169
        %v439 = vadd.f32 %v437, %v438
        %vm440 = vcmp.gt.f32.partialorder %v439, 0.008856
        %v441 = vmax.f32 %v439, 1e-20
        %v443 = vcvt.s32.f32 %v441
        %v444 = vmul.f32 %v443, 0.33333334
        %v445 = vsub.f32 1.4204709e+09, %v444
        %v446 = vcvt.f32.s32.to.zero.pseudo %v445
        %v448 = vmul.f32 %v441, 0.33333334
        %v449 = vmul.f32 %v446, %v446
        %v450 = vmul.f32 %v446, 1.3333334
        %v451 = vmul.f32 %v449, %v449
        %v452 = vmul.f32 %v448, %v451
        %v453 = vsub.f32 %v450, %v452
        %v454 = vmul.f32 %v453, %v453
        %v455 = vmul.f32 %v453, 1.3333334
        %v456 = vmul.f32 %v454, %v454
        %v457 = vmul.f32 %v448, %v456
        %v458 = vsub.f32 %v455, %v457
        %v459 = vmul.f32 %v458, %v458
        %v460 = vmul.f32 %v458, 1.3333334
        %v461 = vmul.f32 %v459, %v459
        %v462 = vmul.f32 %v448, %v461
        %v463 = vsub.f32 %v460, %v462
        %v464 = vmul.f32 %v441, %v463
        %v465 = vmul.f32 %v464, %v463
        %v466 = vmul.f32 %v439, 7.787
        %v467 = vadd.f32 %v466, 0.13793103
        %v468 = vsel %vm440, %v465, %v467
        %v469 = vmul.f32 %v468, 116.0
        %v470 = vsub.f32 %v469, 16.0
        %v471 = vmul.f32 %v422, 0.412453
        %v472 = vmul.f32 %v428, 0.35758
        %v473 = vadd.f32 %v471, %v472
        %v474 = vmul.f32 %v434, 0.180423
        %v475 = vadd.f32 %v473, %v474
        %v476 = vmul.f32 %v475, 1.052111
        %v477 = vmul.f32 %v422, 0.019334
        %v478 = vmul.f32 %v428, 0.119193
        %v479 = vadd.f32 %v477, %v478
        %v480 = vmul.f32 %v434, 0.950227
        %v481 = vadd.f32 %v479, %v480
        %v482 = vmul.f32 %v481, 0.91841704
        %vm483 = vcmp.gt.f32.partialorder %v476, 0.008856
        %v484 = vmax.f32 %v476, 1e-20
        %v486 = vcvt.s32.f32 %v484
        %v487 = vmul.f32 %v486, 0.33333334
        %v488 = vsub.f32 1.4204709e+09, %v487
        %v489 = vcvt.f32.s32.to.zero.pseudo %v488
        %v491 = vmul.f32 %v484, 0.33333334
        %v492 = vmul.f32 %v489, %v489
        %v493 = vmul.f32 %v489, 1.3333334
        %v494 = vmul.f32 %v492, %v492
        %v495 = vmul.f32 %v491, %v494
        %v496 = vsub.f32 %v493, %v495
        %v497 = vmul.f32 %v496, %v496
        %v498 = vmul.f32 %v496, 1.3333334
        %v499 = vmul.f32 %v497, %v497
        %v500 = vmul.f32 %v491, %v499
        %v501 = vsub.f32 %v498, %v500
        %v502 = vmul.f32 %v501, %v501
        %v503 = vmul.f32 %v501, 1.3333334
        %v504 = vmul.f32 %v502, %v502
        %v505 = vmul.f32 %v491, %v504
        %v506 = vsub.f32 %v503, %v505
        %v507 = vmul.f32 %v484, %v506
        %v508 = vmul.f32 %v507, %v506
        %v509 = vmul.f32 %v476, 7.787
        %v510 = vadd.f32 %v509, 0.13793103
        %v511 = vsel %vm483, %v508, %v510
        %v512 = vsub.f32 %v511, %v468
        %v513 = vmul.f32 %v512, 500.0
        %vm514 = vcmp.gt.f32.partialorder %v482, 0.008856
        %v515 = vmax.f32 %v482, 1e-20
        %v517 = vcvt.s32.f32 %v515
        %v518 = vmul.f32 %v517, 0.33333334
        %v519 = vsub.f32 1.4204709e+09, %v518
        %v520 = vcvt.f32.s32.to.zero.pseudo %v519
        %v522 = vmul.f32 %v515, 0.33333334
        %v523 = vmul.f32 %v520, %v520
        %v524 = vmul.f32 %v520, 1.3333334
        %v525 = vmul.f32 %v523, %v523
        %v526 = vmul.f32 %v522, %v525
        %v527 = vsub.f32 %v524, %v526
        %v528 = vmul.f32 %v527, %v527
        %v529 = vmul.f32 %v527, 1.3333334
        %v530 = vmul.f32 %v528, %v528
        %v531 = vmul.f32 %v522, %v530
        %v532 = vsub.f32 %v529, %v531
        %v533 = vmul.f32 %v532, %v532
        %v534 = vmul.f32 %v532, 1.3333334
        %v535 = vmul.f32 %v533, %v533
        %v536 = vmul.f32 %v522, %v535
        %v537 = vsub.f32 %v534, %v536
        %v538 = vmul.f32 %v515, %v537
        %v539 = vmul.f32 %v538, %v537
        %v540 = vmul.f32 %v482, 7.787
        %v541 = vadd.f32 %v540, 0.13793103
        %v542 = vsel %vm514, %v539, %v541
        %v543 = vsub.f32 %v468, %v542
        %v544 = vmul.f32 %v543, 200.0
        %v545 = vsub.f32 %v334, %v470
        %v546 = vand.u32 2147483647, %v545
        %v547 = vmul.f32 %v546, 0.01
        %v548 = vadd.f32 %v547, 0.0
        %v549 = vsub.f32 %v377, %v513
        %v550 = vand.u32 2147483647, %v549
        %v551 = vmul.f32 %v550, 0.003921569
        %v552 = vadd.f32 %v548, %v551
        %v553 = vsub.f32 %v408, %v544
        %v554 = vand.u32 2147483647, %v553
        %v555 = vmul.f32 %v554, 0.003921569
        %v556 = vadd.f32 %v552, %v555
        %vm557 = vcmask 1041408
        %v558 = vsel %vm557, %v556, 0.0
        %v559 = vrot.slane %v558, 4
        %v560 = vadd.f32 %v558, %v559
        %v561 = vrot.slane %v560, 2
        %v562 = vadd.f32 %v560, %v561
        %v563 = vrot.slane %v562, 1
        %v564 = vadd.f32 %v562, %v563
        %v565 = vmul.f32 %v564, 0.125
        %v566 = vadd.f32 %v565, 0.0
        %v567 = vld [vmem:[%s246] sm:$0xff]
        %v568 = vadd.f32 %v567, %v566
        %569 = vst [vmem:[%s246] sm:$0xff] %v568
        %s570 = sand.u32 %s119, 1
        %s571 = scalar_lea.sflag [#allocation4], %s570
        %s572 = sand.u32 %s119, 1
        %s573 = smul.addr %s572, 8
        %s574 = scalar_lea.vmem [#allocation7], %s573
        // Predicated region
        $region41: #{tpu_custom_call.1} parent=27 // pred_check
          %p575 = pneg %p129
        $region42: #{tpu_custom_call.1} parent=27 // pred_check_branch
          %577 = sbr.rel (%p575) target = $region44
        $region43: #{tpu_custom_call.1} parent=27 // pred_region
          %s579 = ssub.s32 128, 128
          %580 = vsyncadd %s571, %s579
          %s581 = sadd.s32 %s28, %s27
          %s582 = smul.addr %s581, 128
          %s583 = scalar_lea.hbm %s2, %s582
          %s585 = sshll.u32 %s574, 4
          %s586 = int_to_ptr.vmem [resolvable:$true] %s585
          %588 = dma.vmem_to_hbm [thread:$0]  %s586, 128, %s583, %s571
        $region44: #{tpu_custom_call.1} parent=27 // pred_fallthru
          _
      $region28: #{tpu_custom_call.1} parent=5 // pred_fallthru
        _
      %p589 = scmp.le.s32.totalorder 2, %s17
      // Predicated region
      $region45: #{tpu_custom_call.1} parent=5 // pred_check
        %p590 = pneg %p589
      $region46: #{tpu_custom_call.1} parent=5 // pred_check_branch
        %592 = sbr.rel (%p590) target = $region48
      $region47: #{tpu_custom_call.1} parent=5 // pred_region
        %s593 = ssub.s32 %s17, 2
        // Predicated region
        $region49: #{tpu_custom_call.1} parent=47 // pred_check
          %p594 = pneg %p135
        $region50: #{tpu_custom_call.1} parent=47 // pred_check_branch
          %596 = sbr.rel (%p594) target = $region52
        $region51: #{tpu_custom_call.1} parent=47 // pred_region
          %s597 = sand.u32 %s120, 1
          %s598 = scalar_lea.sflag [#allocation4], %s597
          %s599 = sand.u32 %s120, 1
          %s600 = smul.addr %s599, 8
          %s601 = scalar_lea.vmem [#allocation7], %s600
          %602 = dma.done %s598, 128
        $region52: #{tpu_custom_call.1} parent=47 // pred_fallthru
          _
      $region48: #{tpu_custom_call.1} parent=5 // pred_fallthru
        _
    $region6: #{tpu_custom_call.1} parent=1 // loop_footer
      %s21 = sadd.s32 1, %s17
    $region7: #{tpu_custom_call.1} parent=1 // loop_footer_branch
      %16 = sbr.rel target = $region3
    $region8: #{tpu_custom_call.1} parent=1 // loop_exit
      _
    %603 = vsyncpa [#allocation3], 1
    %s604 = scalar_lea.sflag [#allocation3], 1
    %605 = vsyncpa %s604, 1
    %606 = vsyncpa [#allocation6], 1
    %s607 = scalar_lea.sflag [#allocation6], 1
    %608 = vsyncpa %s607, 1
    %609 = vsyncpa [#allocation4], 1
    %s610 = scalar_lea.sflag [#allocation4], 1
    %611 = vsyncpa %s610, 1

</llo_original>
